<compile_context>
chip_gen: v7x
topology: tpu7x:2x2x1
jax: 0.10.0
libtpu: 0.0.40
codegen_flags: <defaults>
</compile_context>

<pallas_src>
import numpy as np
import jax
import jax.numpy as jnp
from jax import lax
from jax.experimental import pallas as pl
from jax.experimental.pallas import tpu as pltpu


def conv_module_wrapper_forward(x, params, *, stride=1, padding=1):
    """x: (B, Cin, H, W) f32. params: conv_w (Cout,Cin,kh,kw), conv_b (Cout,), eca_w (k,)."""
    weight, bias, w1d = params["conv_w"], params["conv_b"], params["eca_w"]
    B, Cin, H, W = x.shape
    Cout, _, kh, kw = weight.shape
    k_eca = int(w1d.shape[0])
    pad_e = (k_eca - 1) // 2

    # TODO(synk): SRU module definition is not provided in the reference source; treated as identity.
    if stride != 1 or kh != kw or (kh - 1) != 2 * padding:
        # TODO(synk): fused flat-spatial layout assumes stride=1 "same" conv (the configuration
        # used by this module instance); other configs need a different spatial layout.
        raise NotImplementedError("fused kernel supports stride=1 'same' convolutions only")

    p = padding
    Ho, Wo = H, W                      # "same" conv
    S = Ho * Wo                        # output pixels per (b, c) = kernel lane axis (multiple of 128 here)
    HW = H * W
    Cin_p = -(-Cin // 8) * 8           # pad channels so every tap block is sublane-group aligned
    K = kh * kw * Cin_p                # contraction depth of the single stacked matmul
    OFF = 128                          # lane-aligned start of real data inside the halo buffer
    assert p * (W + 1) <= OFF
    Lx = -(-(OFF + HW + p * (W + 1)) // 128) * 128   # halo-buffer length, covers every tap shift

    # ---- tiny layout prep in XLA: no padded HBM copy of x, just a free contiguous reshape ----
    x3 = x.reshape(B, Cin, HW).astype(jnp.float32)

    # stacked conv weight (Cout, K), K index = (i*kw + j)*Cin_p + ci; bf16 MXU operand
    w_pad = jnp.pad(weight.astype(jnp.float32), ((0, 0), (0, Cin_p - Cin), (0, 0), (0, 0)))
    w_stack = w_pad.transpose(0, 2, 3, 1).reshape(Cout, K).astype(jnp.bfloat16)
    bias2 = bias.reshape(Cout, 1).astype(jnp.float32)

    # C x C band matrix implementing Conv1d(1,1,k,pad=(k-1)//2,bias=False) over the channel axis
    ch = jnp.arange(Cout)
    d = ch[None, :] - ch[:, None] + pad_e
    toep = jnp.where((d >= 0) & (d < k_eca), w1d[jnp.clip(d, 0, k_eca - 1)], 0.0).astype(jnp.float32)

    # batch blocking: default keeps 2 parallel grid steps (feeds both v7x TensorCores); on
    # single-TC v5e/v6e a larger Bb / fewer steps is preferable -- per-step VMEM is ~0.1 MiB,
    # far under the scoped limit on all generations, so Bb can be raised freely.
    Bb = B // 2 if (B >= 2 and B % 2 == 0) else 1
    n_steps = B // Bb

    inv_s = 1.0 / float(S)
    taps = [(i, j) for i in range(kh) for j in range(kw)]
    w_pow2 = (W & (W - 1)) == 0

    def kernel(x_ref, w_ref, b_ref, t_ref, o_ref, xbuf_ref, stk_ref):
        # Zero the halo buffer every step (it is only a few vregs) so the zero halo is valid on
        # every core regardless of how the parallel grid is split across TensorCores.
        xbuf_ref[...] = jnp.zeros((Cin_p, Lx), jnp.float32)

        # in-kernel column index (replaces the DMA'd valid-pixel mask operand of the old version)
        col = lax.broadcasted_iota(jnp.int32, (1, S), 1)
        if w_pow2:
            c_idx = jnp.bitwise_and(col, W - 1)
        else:
            cf = col.astype(jnp.float32)
            c_idx = (cf - W * jnp.floor(cf * (1.0 / W))).astype(jnp.int32)
        # per-tap column validity: masks the W-wraparound of the flat spatial layout
        valid_by_j = []
        for j in range(kw):
            lo, hi = p - j, W + p - j
            valid_by_j.append(((c_idx >= lo) & (c_idx < hi)) if (lo > 0 or hi < W) else None)

        b = b_ref[...]           # (Cout, 1)  f32
        w_stk = w_ref[...]       # (Cout, K)  bf16
        toep_m = t_ref[...]      # (Cout, Cout) f32

        for bb in range(Bb):
            # place this image inside the zero halo (channel pad + H halo come for free)
            xbuf_ref[0:Cin, OFF:OFF + HW] = x_ref[bb]
            xb = xbuf_ref[...]                                            # (Cin_p, Lx)

            # build the (K, S) stacked im2col operand: one lane-shifted slice per tap, stored at
            # sublane-aligned offsets -> ONE K-deep matmul instead of kh*kw tiny MXU pushes
            for t, (i, j) in enumerate(taps):
                start = OFF + (i - p) * W + (j - p)
                sl = xb[:, start:start + S]
                if valid_by_j[j] is not None:
                    sl = jnp.where(valid_by_j[j], sl, 0.0)
                stk_ref[t * Cin_p:(t + 1) * Cin_p, :] = sl

            # Conv2d as a single (Cout,K)@(K,S) bf16 matmul with f32 accumulation
            y = jnp.dot(w_stk, stk_ref[...].astype(jnp.bfloat16),
                        preferred_element_type=jnp.float32)               # (Cout, S)
            y = jnp.maximum(y + b, 0.0)                                    # fused bias + ReLU

            # avg-pool + PLV-pool fused into ONE lane reduction (all S lanes are real pixels now)
            contrib = y + jnp.where(y > b, 1.0, 0.0)
            merged = jnp.sum(contrib, axis=-1, keepdims=True) * inv_s      # (Cout, 1)

            # ECA Conv1d over channels via the CxC band matrix.
            # TODO(synk): review suggests a VPU/XLU form (pltpu.roll / (1,C) reshape); kept on the
            # MXU because that form needs a sublane<->lane relayout of the (C,1) vector, the only
            # op here without a guaranteed lowering -- at C=8 this is one tiny extra MXU push.
            zb = jnp.dot(toep_m, jnp.broadcast_to(merged, (Cout, Cout)),
                         preferred_element_type=jnp.float32)
            z = zb[:, 0:1]                                                 # (Cout, 1)

            # hard sigmoid + channel attention, fused (y never leaves the kernel unscaled)
            attn = jnp.minimum(jnp.maximum(z + 3.0, 0.0), 6.0) * (1.0 / 6.0)
            o_ref[bb] = y * attn

    cost = pl.CostEstimate(
        flops=2 * B * Cout * K * S + 8 * B * Cout * S + 2 * B * Cout * Cout * Cout,
        transcendentals=0,
        bytes_accessed=4 * (B * Cin * HW + B * Cout * S + Cout + Cout * Cout) + 2 * Cout * K,
    )

    out = pl.pallas_call(
        kernel,
        out_shape=jax.ShapeDtypeStruct((B, Cout, S), jnp.float32),
        grid=(n_steps,),
        in_specs=[
            pl.BlockSpec((Bb, Cin, HW), lambda bblk: (bblk, 0, 0)),   # raw per-batch x, no HBM pad copy
            pl.BlockSpec((Cout, K), lambda bblk: (0, 0)),             # stacked conv weights (bf16)
            pl.BlockSpec((Cout, 1), lambda bblk: (0, 0)),             # conv bias
            pl.BlockSpec((Cout, Cout), lambda bblk: (0, 0)),          # ECA band matrix
        ],
        out_specs=pl.BlockSpec((Bb, Cout, S), lambda bblk: (bblk, 0, 0)),
        scratch_shapes=[
            pltpu.VMEM((Cin_p, Lx), jnp.float32),                     # zero-halo input buffer
            pltpu.VMEM((K, S), jnp.float32),                          # stacked im2col operand
        ],
        compiler_params=pltpu.CompilerParams(dimension_semantics=("parallel",)),
        cost_estimate=cost,
    )(x3, w_stack, bias2, toep)

    # lane-dense (B, Cout, Ho*Wo) -> NCHW; contiguous reshape, no strip / extra HBM pass
    return out.reshape(B, Cout, Ho, Wo)


# ----------------------------------------------------------------------------------
# Pure-JAX reference (correctness check)
# ----------------------------------------------------------------------------------
def _ref_forward(x, params, *, stride=1, padding=1):
    w, b, w1d = params["conv_w"], params["conv_b"], params["eca_w"]
    y = lax.conv_general_dilated(
        x, w, (stride, stride), [(padding, padding), (padding, padding)],
        dimension_numbers=("NCHW", "OIHW", "NCHW"))
    y = jnp.maximum(y + b[None, :, None, None], 0.0)
    B, C, H, W = y.shape
    k = w1d.shape[0]
    pad = (k - 1) // 2
    avg = y.mean(axis=(2, 3))
    plv = (y > b[None, :, None, None]).astype(jnp.float32).mean(axis=(2, 3))
    merged = avg + plv
    mp = jnp.pad(merged, ((0, 0), (pad, pad)))
    z = jnp.stack([jnp.sum(mp[:, c:c + k] * w1d, axis=1) for c in range(C)], axis=1)
    attn = jnp.clip(z + 3.0, 0.0, 6.0) / 6.0
    return y * attn[:, :, None, None]


if __name__ == "__main__":
    # Module config consistent with the forward pass
    in_channel, out_channels, kernel_size, stride, padding = 4, 8, 3, 1, 1
    B, H, W = 2, 16, 16
    k_eca = 5

    key = jax.random.PRNGKey(0)
    kx, kw_, kb, ke = jax.random.split(key, 4)
    x = jax.random.normal(kx, (B, in_channel, H, W), dtype=jnp.float32)
    params = {
        "conv_w": 0.1 * jax.random.normal(
            kw_, (out_channels, in_channel, kernel_size, kernel_size), jnp.float32),
        "conv_b": 0.1 * jax.random.normal(kb, (out_channels,), jnp.float32),
        "eca_w": 0.2 * jax.random.normal(ke, (k_eca,), jnp.float32),
    }

    fwd = jax.jit(lambda xx: conv_module_wrapper_forward(
        xx, params, stride=stride, padding=padding))
    out = jax.block_until_ready(fwd(x))

    out_ref = _ref_forward(x, params, stride=stride, padding=padding)
    # bf16 MXU operands in the fused conv (f32 accumulate) -> bf16-appropriate tolerance
    np.testing.assert_allclose(np.asarray(out), np.asarray(out_ref), rtol=2e-2, atol=2e-2)
    assert out.shape == (B, out_channels, H, W)
    print("KERNEL_OK")
</pallas_src>

<mosaic_0001>
module attributes {stable_mosaic.version = 11 : i64} {
  func.func @kernel(%arg0: i32, %arg1: memref<1x4x256xf32, #tpu.memory_space<vmem>>, %arg2: memref<8x72xbf16, #tpu.memory_space<vmem>>, %arg3: memref<8x1xf32, #tpu.memory_space<vmem>>, %arg4: memref<8x8xf32, #tpu.memory_space<vmem>>, %arg5: memref<1x8x256xf32, #tpu.memory_space<vmem>>, %arg6: memref<8x512xf32, #tpu.memory_space<vmem>>, %arg7: memref<72x256xf32, #tpu.memory_space<vmem>>) attributes {dimension_semantics = [#tpu.dimension_semantics<parallel>], iteration_bounds = array<i64: 2>, scalar_prefetch = 0 : i64, scratch_operands = 2 : i64, tpu.core_type = #tpu.core_type<tc>, window_params = [{transform_indices = @transform_0, window_bounds = array<i64: 1, 4, 256>}, {pipeline_mode = #tpu.pipeline_mode<synchronous>, transform_indices = @transform_1, window_bounds = array<i64: 8, 72>}, {pipeline_mode = #tpu.pipeline_mode<synchronous>, transform_indices = @transform_2, window_bounds = array<i64: 8, 1>}, {pipeline_mode = #tpu.pipeline_mode<synchronous>, transform_indices = @transform_3, window_bounds = array<i64: 8, 8>}, {transform_indices = @transform_4, window_bounds = array<i64: 1, 8, 256>}]} {
    %cst = arith.constant 0.000000e+00 : f32
    %0 = vector.broadcast %cst : f32 to vector<8x512xf32>
    %c0 = arith.constant 0 : index
    %c0_0 = arith.constant 0 : index
    %1 = vector.load %arg6[%c0, %c0_0] : memref<8x512xf32, #tpu.memory_space<vmem>>, vector<8x512xf32>
    tpu.vector_store %arg6[%c0, %c0_0], %0 {strides = array<i32>} : memref<8x512xf32, #tpu.memory_space<vmem>>, vector<8x512xf32>,
    %2 = tpu.iota {dimensions = array<i32: 1>} : vector<1x256xi32>
    %c15_i32 = arith.constant 15 : i32
    %3 = vector.broadcast %c15_i32 : i32 to vector<1x256xi32>
    %4 = arith.andi %2, %3 : vector<1x256xi32>
    %c1_i32 = arith.constant 1 : i32
    %5 = vector.broadcast %c1_i32 : i32 to vector<1x256xi32>
    %6 = arith.cmpi sge, %4, %5 : vector<1x256xi32>
    %c17_i32 = arith.constant 17 : i32
    %7 = vector.broadcast %c17_i32 : i32 to vector<1x256xi32>
    %8 = arith.cmpi slt, %4, %7 : vector<1x256xi32>
    %9 = arith.andi %6, %8 : vector<1x256xi1>
    %c-1_i32 = arith.constant -1 : i32
    %10 = vector.broadcast %c-1_i32 : i32 to vector<1x256xi32>
    %11 = arith.cmpi sge, %4, %10 : vector<1x256xi32>
    %c15_i32_1 = arith.constant 15 : i32
    %12 = vector.broadcast %c15_i32_1 : i32 to vector<1x256xi32>
    %13 = arith.cmpi slt, %4, %12 : vector<1x256xi32>
    %14 = arith.andi %11, %13 : vector<1x256xi1>
    %c0_2 = arith.constant 0 : index
    %c0_3 = arith.constant 0 : index
    %15 = vector.load %arg3[%c0_2, %c0_3] : memref<8x1xf32, #tpu.memory_space<vmem>>, vector<8x1xf32>
    %c0_4 = arith.constant 0 : index
    %c0_5 = arith.constant 0 : index
    %16 = vector.load %arg2[%c0_4, %c0_5] : memref<8x72xbf16, #tpu.memory_space<vmem>>, vector<8x72xbf16>
    %c0_6 = arith.constant 0 : index
    %c0_7 = arith.constant 0 : index
    %17 = vector.load %arg4[%c0_6, %c0_7] : memref<8x8xf32, #tpu.memory_space<vmem>>, vector<8x8xf32>
    %c0_8 = arith.constant 0 : index
    %c0_9 = arith.constant 0 : index
    %c0_10 = arith.constant 0 : index
    %18 = vector.load %arg1[%c0_8, %c0_9, %c0_10] : memref<1x4x256xf32, #tpu.memory_space<vmem>>, vector<1x4x256xf32>
    %19 = vector.shape_cast %18 : vector<1x4x256xf32> to vector<4x256xf32>
    %c0_11 = arith.constant 0 : index
    %c128 = arith.constant 128 : index
    %20 = vector.load %arg6[%c0_11, %c128] : memref<8x512xf32, #tpu.memory_space<vmem>>, vector<4x256xf32>
    tpu.vector_store %arg6[%c0_11, %c128], %19 {strides = array<i32>} : memref<8x512xf32, #tpu.memory_space<vmem>>, vector<4x256xf32>,
    %c0_12 = arith.constant 0 : index
    %c0_13 = arith.constant 0 : index
    %21 = vector.load %arg6[%c0_12, %c0_13] : memref<8x512xf32, #tpu.memory_space<vmem>>, vector<8x512xf32>
    %22 = vector.extract_strided_slice %21 {offsets = [0, 111], sizes = [8, 256], strides = [1, 1]} : vector<8x512xf32> to vector<8x256xf32>
    %cst_14 = arith.constant 0.000000e+00 : f32
    %23 = vector.shape_cast %9 : vector<1x256xi1> to vector<1x256xi1>
    %24 = vector.broadcast %23 : vector<1x256xi1> to vector<8x256xi1>
    %25 = vector.broadcast %cst_14 : f32 to vector<8x256xf32>
    %26 = arith.select %24, %22, %25 : vector<8x256xi1>, vector<8x256xf32>
    %c0_15 = arith.constant 0 : index
    %c0_16 = arith.constant 0 : index
    %27 = vector.load %arg7[%c0_15, %c0_16] : memref<72x256xf32, #tpu.memory_space<vmem>>, vector<8x256xf32>
    tpu.vector_store %arg7[%c0_15, %c0_16], %26 {strides = array<i32>} : memref<72x256xf32, #tpu.memory_space<vmem>>, vector<8x256xf32>,
    %28 = vector.extract_strided_slice %21 {offsets = [0, 112], sizes = [8, 256], strides = [1, 1]} : vector<8x512xf32> to vector<8x256xf32>
    %c8 = arith.constant 8 : index
    %c0_17 = arith.constant 0 : index
    %29 = vector.load %arg7[%c8, %c0_17] : memref<72x256xf32, #tpu.memory_space<vmem>>, vector<8x256xf32>
    tpu.vector_store %arg7[%c8, %c0_17], %28 {strides = array<i32>} : memref<72x256xf32, #tpu.memory_space<vmem>>, vector<8x256xf32>,
    %30 = vector.extract_strided_slice %21 {offsets = [0, 113], sizes = [8, 256], strides = [1, 1]} : vector<8x512xf32> to vector<8x256xf32>
    %cst_18 = arith.constant 0.000000e+00 : f32
    %31 = vector.shape_cast %14 : vector<1x256xi1> to vector<1x256xi1>
    %32 = vector.broadcast %31 : vector<1x256xi1> to vector<8x256xi1>
    %33 = vector.broadcast %cst_18 : f32 to vector<8x256xf32>
    %34 = arith.select %32, %30, %33 : vector<8x256xi1>, vector<8x256xf32>
    %c16 = arith.constant 16 : index
    %c0_19 = arith.constant 0 : index
    %35 = vector.load %arg7[%c16, %c0_19] : memref<72x256xf32, #tpu.memory_space<vmem>>, vector<8x256xf32>
    tpu.vector_store %arg7[%c16, %c0_19], %34 {strides = array<i32>} : memref<72x256xf32, #tpu.memory_space<vmem>>, vector<8x256xf32>,
    %36 = vector.extract_strided_slice %21 {offsets = [0, 127], sizes = [8, 256], strides = [1, 1]} : vector<8x512xf32> to vector<8x256xf32>
    %cst_20 = arith.constant 0.000000e+00 : f32
    %37 = vector.shape_cast %9 : vector<1x256xi1> to vector<1x256xi1>
    %38 = vector.broadcast %37 : vector<1x256xi1> to vector<8x256xi1>
    %39 = vector.broadcast %cst_20 : f32 to vector<8x256xf32>
    %40 = arith.select %38, %36, %39 : vector<8x256xi1>, vector<8x256xf32>
    %c24 = arith.constant 24 : index
    %c0_21 = arith.constant 0 : index
    %41 = vector.load %arg7[%c24, %c0_21] : memref<72x256xf32, #tpu.memory_space<vmem>>, vector<8x256xf32>
    tpu.vector_store %arg7[%c24, %c0_21], %40 {strides = array<i32>} : memref<72x256xf32, #tpu.memory_space<vmem>>, vector<8x256xf32>,
    %42 = vector.extract_strided_slice %21 {offsets = [0, 128], sizes = [8, 256], strides = [1, 1]} : vector<8x512xf32> to vector<8x256xf32>
    %c32 = arith.constant 32 : index
    %c0_22 = arith.constant 0 : index
    %43 = vector.load %arg7[%c32, %c0_22] : memref<72x256xf32, #tpu.memory_space<vmem>>, vector<8x256xf32>
    tpu.vector_store %arg7[%c32, %c0_22], %42 {strides = array<i32>} : memref<72x256xf32, #tpu.memory_space<vmem>>, vector<8x256xf32>,
    %44 = vector.extract_strided_slice %21 {offsets = [0, 129], sizes = [8, 256], strides = [1, 1]} : vector<8x512xf32> to vector<8x256xf32>
    %cst_23 = arith.constant 0.000000e+00 : f32
    %45 = vector.shape_cast %14 : vector<1x256xi1> to vector<1x256xi1>
    %46 = vector.broadcast %45 : vector<1x256xi1> to vector<8x256xi1>
    %47 = vector.broadcast %cst_23 : f32 to vector<8x256xf32>
    %48 = arith.select %46, %44, %47 : vector<8x256xi1>, vector<8x256xf32>
    %c40 = arith.constant 40 : index
    %c0_24 = arith.constant 0 : index
    %49 = vector.load %arg7[%c40, %c0_24] : memref<72x256xf32, #tpu.memory_space<vmem>>, vector<8x256xf32>
    tpu.vector_store %arg7[%c40, %c0_24], %48 {strides = array<i32>} : memref<72x256xf32, #tpu.memory_space<vmem>>, vector<8x256xf32>,
    %50 = vector.extract_strided_slice %21 {offsets = [0, 143], sizes = [8, 256], strides = [1, 1]} : vector<8x512xf32> to vector<8x256xf32>
    %cst_25 = arith.constant 0.000000e+00 : f32
    %51 = vector.shape_cast %9 : vector<1x256xi1> to vector<1x256xi1>
    %52 = vector.broadcast %51 : vector<1x256xi1> to vector<8x256xi1>
    %53 = vector.broadcast %cst_25 : f32 to vector<8x256xf32>
    %54 = arith.select %52, %50, %53 : vector<8x256xi1>, vector<8x256xf32>
    %c48 = arith.constant 48 : index
    %c0_26 = arith.constant 0 : index
    %55 = vector.load %arg7[%c48, %c0_26] : memref<72x256xf32, #tpu.memory_space<vmem>>, vector<8x256xf32>
    tpu.vector_store %arg7[%c48, %c0_26], %54 {strides = array<i32>} : memref<72x256xf32, #tpu.memory_space<vmem>>, vector<8x256xf32>,
    %56 = vector.extract_strided_slice %21 {offsets = [0, 144], sizes = [8, 256], strides = [1, 1]} : vector<8x512xf32> to vector<8x256xf32>
    %c56 = arith.constant 56 : index
    %c0_27 = arith.constant 0 : index
    %57 = vector.load %arg7[%c56, %c0_27] : memref<72x256xf32, #tpu.memory_space<vmem>>, vector<8x256xf32>
    tpu.vector_store %arg7[%c56, %c0_27], %56 {strides = array<i32>} : memref<72x256xf32, #tpu.memory_space<vmem>>, vector<8x256xf32>,
    %58 = vector.extract_strided_slice %21 {offsets = [0, 145], sizes = [8, 256], strides = [1, 1]} : vector<8x512xf32> to vector<8x256xf32>
    %cst_28 = arith.constant 0.000000e+00 : f32
    %59 = vector.shape_cast %14 : vector<1x256xi1> to vector<1x256xi1>
    %60 = vector.broadcast %59 : vector<1x256xi1> to vector<8x256xi1>
    %61 = vector.broadcast %cst_28 : f32 to vector<8x256xf32>
    %62 = arith.select %60, %58, %61 : vector<8x256xi1>, vector<8x256xf32>
    %c64 = arith.constant 64 : index
    %c0_29 = arith.constant 0 : index
    %63 = vector.load %arg7[%c64, %c0_29] : memref<72x256xf32, #tpu.memory_space<vmem>>, vector<8x256xf32>
    tpu.vector_store %arg7[%c64, %c0_29], %62 {strides = array<i32>} : memref<72x256xf32, #tpu.memory_space<vmem>>, vector<8x256xf32>,
    %c0_30 = arith.constant 0 : index
    %c0_31 = arith.constant 0 : index
    %64 = vector.load %arg7[%c0_30, %c0_31] : memref<72x256xf32, #tpu.memory_space<vmem>>, vector<72x256xf32>
    %65 = arith.truncf %64 : vector<72x256xf32> to vector<72x256xbf16>
    %cst_32 = arith.constant dense<0.000000e+00> : vector<8x256xf32>
    %66 = tpu.matmul %16, %65, %cst_32 {dimension_numbers = #tpu.dot_dimension_numbers<[1], [0], [0], [1], [0, 0, 1, 1], [], []>} : vector<8x72xbf16>, vector<72x256xbf16>, vector<8x256xf32> -> vector<8x256xf32>
    %67 = vector.broadcast %15 : vector<8x1xf32> to vector<8x256xf32>
    %68 = arith.addf %66, %67 : vector<8x256xf32>
    %cst_33 = arith.constant 0.000000e+00 : f32
    %69 = vector.broadcast %cst_33 : f32 to vector<8x256xf32>
    %70 = arith.maximumf %68, %69 : vector<8x256xf32>
    %71 = vector.broadcast %15 : vector<8x1xf32> to vector<8x256xf32>
    %72 = arith.cmpf ogt, %70, %71 : vector<8x256xf32>
    %cst_34 = arith.constant 1.000000e+00 : f32
    %cst_35 = arith.constant 0.000000e+00 : f32
    %73 = vector.broadcast %cst_34 : f32 to vector<8x256xf32>
    %74 = vector.broadcast %cst_35 : f32 to vector<8x256xf32>
    %75 = arith.select %72, %73, %74 : vector<8x256xi1>, vector<8x256xf32>
    %76 = arith.addf %70, %75 : vector<8x256xf32>
    %cst_36 = arith.constant dense<0.000000e+00> : vector<8xf32>
    %77 = vector.multi_reduction <add>, %76, %cst_36 [1] : vector<8x256xf32> to vector<8xf32>
    %78 = vector.shape_cast %77 : vector<8xf32> to vector<8x1xf32>
    %cst_37 = arith.constant 3.906250e-03 : f32
    %79 = vector.broadcast %cst_37 : f32 to vector<8x1xf32>
    %80 = arith.mulf %78, %79 : vector<8x1xf32>
    %81 = vector.shape_cast %80 : vector<8x1xf32> to vector<8x1xf32>
    %82 = vector.broadcast %81 : vector<8x1xf32> to vector<8x8xf32>
    %cst_38 = arith.constant dense<0.000000e+00> : vector<8x8xf32>
    %83 = tpu.matmul %17, %82, %cst_38 {dimension_numbers = #tpu.dot_dimension_numbers<[1], [0], [0], [1], [0, 0, 1, 1], [], []>} : vector<8x8xf32>, vector<8x8xf32>, vector<8x8xf32> -> vector<8x8xf32>
    %84 = vector.extract_strided_slice %83 {offsets = [0, 0], sizes = [8, 1], strides = [1, 1]} : vector<8x8xf32> to vector<8x1xf32>
    %cst_39 = arith.constant 3.000000e+00 : f32
    %85 = vector.broadcast %cst_39 : f32 to vector<8x1xf32>
    %86 = arith.addf %84, %85 : vector<8x1xf32>
    %cst_40 = arith.constant 0.000000e+00 : f32
    %87 = vector.broadcast %cst_40 : f32 to vector<8x1xf32>
    %88 = arith.maximumf %86, %87 : vector<8x1xf32>
    %cst_41 = arith.constant 6.000000e+00 : f32
    %89 = vector.broadcast %cst_41 : f32 to vector<8x1xf32>
    %90 = arith.minimumf %88, %89 : vector<8x1xf32>
    %cst_42 = arith.constant 0.166666672 : f32
    %91 = vector.broadcast %cst_42 : f32 to vector<8x1xf32>
    %92 = arith.mulf %90, %91 : vector<8x1xf32>
    %93 = vector.broadcast %92 : vector<8x1xf32> to vector<8x256xf32>
    %94 = arith.mulf %70, %93 : vector<8x256xf32>
    %c0_43 = arith.constant 0 : index
    %c0_44 = arith.constant 0 : index
    %c0_45 = arith.constant 0 : index
    %95 = vector.load %arg5[%c0_43, %c0_44, %c0_45] : memref<1x8x256xf32, #tpu.memory_space<vmem>>, vector<1x8x256xf32>
    %96 = vector.shape_cast %95 : vector<1x8x256xf32> to vector<8x256xf32>
    %97 = vector.shape_cast %94 : vector<8x256xf32> to vector<1x8x256xf32>
    tpu.vector_store %arg5[%c0_43, %c0_44, %c0_45], %97 {strides = array<i32>} : memref<1x8x256xf32, #tpu.memory_space<vmem>>, vector<1x8x256xf32>,
    return
  }
  func.func @transform_0(%arg0: i32) -> (i32, i32, i32) {
    %c0_i32 = arith.constant 0 : i32
    %c0_i32_0 = arith.constant 0 : i32
    %c0_i32_1 = arith.constant 0 : i32
    return %arg0, %c0_i32, %c0_i32_0 : i32, i32, i32
  }
  func.func @transform_1(%arg0: i32) -> (i32, i32) {
    %c0_i32 = arith.constant 0 : i32
    %c0_i32_0 = arith.constant 0 : i32
    %c0_i32_1 = arith.constant 0 : i32
    return %c0_i32, %c0_i32_0 : i32, i32
  }
  func.func @transform_2(%arg0: i32) -> (i32, i32) {
    %c0_i32 = arith.constant 0 : i32
    %c0_i32_0 = arith.constant 0 : i32
    %c0_i32_1 = arith.constant 0 : i32
    return %c0_i32, %c0_i32_0 : i32, i32
  }
  func.func @transform_3(%arg0: i32) -> (i32, i32) {
    %c0_i32 = arith.constant 0 : i32
    %c0_i32_0 = arith.constant 0 : i32
    %c0_i32_1 = arith.constant 0 : i32
    return %c0_i32, %c0_i32_0 : i32, i32
  }
  func.func @transform_4(%arg0: i32) -> (i32, i32, i32) {
    %c0_i32 = arith.constant 0 : i32
    %c0_i32_0 = arith.constant 0 : i32
    %c0_i32_1 = arith.constant 0 : i32
    return %arg0, %c0_i32, %c0_i32_0 : i32, i32, i32
  }
}

</mosaic_0001>

<llo_original>
// kernel: _lambda_.1
$region0: #{_lambda_.1}
  #allocation0 [shape = 'u32[]', space=smem, size = 0x4, offset = 0x4, fixed_abs, tag = 'smem constant byte address 0x4 - core index']
  #allocation1 [shape = 'u32[144,128]{1,0:T(1,128)}', space=vmem, size = 0x12000, scoped, tag = 'internal scratch']
  #allocation2 [shape = 'f32[8,512]{1,0:T(8,128)}', space=vmem, size = 0x4000, scoped, tag = 'scratch operand']
  #allocation3 [shape = 'f32[72,256]{1,0:T(8,128)}', space=vmem, size = 0x12000, scoped, tag = 'scratch operand']
  %s0 = inlined_call_operand.vmem [shape: f32[2,4,256], index: 0, kind: input, shape index: {}]
  %s1 = inlined_call_operand.vmem [shape: bf16[8,72], index: 1, kind: input, shape index: {}]
  %s2 = inlined_call_operand.vmem [shape: f32[8,1], index: 2, kind: input, shape index: {}]
  %s3 = inlined_call_operand.vmem [shape: f32[8,8], index: 3, kind: input, shape index: {}]
  %s4 = inlined_call_operand.vmem [shape: f32[2,8,256], index: 4, kind: output, shape index: {}]
  %s5 = sld [smem:[#allocation0]]
  $region49: #{_lambda_.1} parent=0
    _
  %s7 = ssub.s32 1, %s5
  %s8 = scalar_select 0, %s7, %s5
  loop: start=0, step=1, limit=4
  $region2: #{_lambda_.1} parent=0 // loop_pre_header
    _
  $region3: #{_lambda_.1} parent=0 // loop_header
    %s10 = sphi 0, %s14
    %p11 = scmp.ge.s32.totalorder %s10, 4
    %s20 = sphi 0, %s22
    %s23 = sphi 0, %s20
    %s24 = sphi 0, %s23
    %s40 = sphi 0, %s24
    %s44 = sphi 0, %s44
    %s46 = sphi 0, %s44
    %s47 = sphi 0, %s46
    %s61 = sphi 0, %s47
    %s65 = sphi 0, %s65
    %s67 = sphi 0, %s65
    %s68 = sphi 0, %s67
    %s82 = sphi 0, %s68
    %s86 = sphi 0, %s86
    %s88 = sphi 0, %s86
    %s89 = sphi 0, %s88
    %s103 = sphi 0, %s89
    %s109 = sphi 0, %s111
    %s112 = sphi 0, %s109
    %s113 = sphi 0, %s112
    %s129 = sphi 0, %s113
  $region4: #{_lambda_.1} parent=0 // loop_header_branch
    %13 = sbr.rel (%p11) target = $region8
  $region5: #{_lambda_.1} parent=0 // loop_body
    %s15 = ssub.s32 %s10, 1
    %s16 = ssub.s32 %s10, 2
    %s17 = sadd.s32 %s10, 1
    %s18 = ssub.s32 %s10, %s17
    %p19 = scmp.eq.s32.totalorder %s18, 0
    %s21 = sadd.s32 %s20, 1
    %s22 = scalar_select %p19, %s20, %s21
    %p25 = pneg %p19
    %p26 = scmp.eq.s32.totalorder %s10, 1
    %p27 = por %p25, %p26
    %p28 = scmp.ne.s32.totalorder %s20, %s23
    %p29 = scmp.eq.s32.totalorder %s10, 0
    %p30 = por %p28, %p29
    %p31 = scmp.ne.s32.totalorder %s20, %s23
    %p32 = scmp.eq.s32.totalorder %s15, 1
    %p33 = por %p31, %p32
    %p34 = scmp.ne.s32.totalorder %s23, %s24
    %p35 = scmp.eq.s32.totalorder %s15, 0
    %p36 = por %p34, %p35
    %p37 = scmp.ne.s32.totalorder %s23, %s24
    %p38 = scmp.eq.s32.totalorder %s16, 1
    %p39 = por %p37, %p38
    %p41 = scmp.ne.s32.totalorder %s24, %s40
    %p42 = scmp.eq.s32.totalorder %s16, 0
    %p43 = por %p41, %p42
    %s45 = sadd.s32 %s44, 1
    %p48 = scmp.eq.s32.totalorder %s10, 1
    %p49 = scmp.ne.s32.totalorder %s44, %s46
    %p50 = scmp.eq.s32.totalorder %s10, 0
    %p51 = por %p49, %p50
    %p52 = scmp.ne.s32.totalorder %s44, %s46
    %p53 = scmp.eq.s32.totalorder %s15, 1
    %p54 = por %p52, %p53
    %p55 = scmp.ne.s32.totalorder %s46, %s47
    %p56 = scmp.eq.s32.totalorder %s15, 0
    %p57 = por %p55, %p56
    %p58 = scmp.ne.s32.totalorder %s46, %s47
    %p59 = scmp.eq.s32.totalorder %s16, 1
    %p60 = por %p58, %p59
    %p62 = scmp.ne.s32.totalorder %s47, %s61
    %p63 = scmp.eq.s32.totalorder %s16, 0
    %p64 = por %p62, %p63
    %s66 = sadd.s32 %s65, 1
    %p69 = scmp.eq.s32.totalorder %s10, 1
    %p70 = scmp.ne.s32.totalorder %s65, %s67
    %p71 = scmp.eq.s32.totalorder %s10, 0
    %p72 = por %p70, %p71
    %p73 = scmp.ne.s32.totalorder %s65, %s67
    %p74 = scmp.eq.s32.totalorder %s15, 1
    %p75 = por %p73, %p74
    %p76 = scmp.ne.s32.totalorder %s67, %s68
    %p77 = scmp.eq.s32.totalorder %s15, 0
    %p78 = por %p76, %p77
    %p79 = scmp.ne.s32.totalorder %s67, %s68
    %p80 = scmp.eq.s32.totalorder %s16, 1
    %p81 = por %p79, %p80
    %p83 = scmp.ne.s32.totalorder %s68, %s82
    %p84 = scmp.eq.s32.totalorder %s16, 0
    %p85 = por %p83, %p84
    %s87 = sadd.s32 %s86, 1
    %p90 = scmp.eq.s32.totalorder %s10, 1
    %p91 = scmp.ne.s32.totalorder %s86, %s88
    %p92 = scmp.eq.s32.totalorder %s10, 0
    %p93 = por %p91, %p92
    %p94 = scmp.ne.s32.totalorder %s86, %s88
    %p95 = scmp.eq.s32.totalorder %s15, 1
    %p96 = por %p94, %p95
    %p97 = scmp.ne.s32.totalorder %s88, %s89
    %p98 = scmp.eq.s32.totalorder %s15, 0
    %p99 = por %p97, %p98
    %p100 = scmp.ne.s32.totalorder %s88, %s89
    %p101 = scmp.eq.s32.totalorder %s16, 1
    %p102 = por %p100, %p101
    %p104 = scmp.ne.s32.totalorder %s89, %s103
    %p105 = scmp.eq.s32.totalorder %s16, 0
    %p106 = por %p104, %p105
    %s107 = ssub.s32 %s10, %s17
    %p108 = scmp.eq.s32.totalorder %s107, 0
    %s110 = sadd.s32 %s109, 1
    %s111 = scalar_select %p108, %s109, %s110
    %p114 = pneg %p108
    %p115 = scmp.eq.s32.totalorder %s10, 1
    %p116 = por %p114, %p115
    %p117 = scmp.ne.s32.totalorder %s109, %s112
    %p118 = scmp.eq.s32.totalorder %s10, 0
    %p119 = por %p117, %p118
    %p120 = scmp.ne.s32.totalorder %s109, %s112
    %p121 = scmp.eq.s32.totalorder %s15, 1
    %p122 = por %p120, %p121
    %p123 = scmp.ne.s32.totalorder %s112, %s113
    %p124 = scmp.eq.s32.totalorder %s15, 0
    %p125 = por %p123, %p124
    %p126 = scmp.ne.s32.totalorder %s112, %s113
    %p127 = scmp.eq.s32.totalorder %s16, 1
    %p128 = por %p126, %p127
    %p130 = scmp.ne.s32.totalorder %s113, %s129
    %p131 = scmp.eq.s32.totalorder %s16, 0
    %p132 = por %p130, %p131
    %p133 = scmp.le.s32.totalorder 1, %s10
    %p134 = scmp.lt.s32.totalorder %s10, 3
    %p135 = pnand %p133, %p134
    %p136 = pneg %p135
    // Predicated region
    $region9: #{_lambda_.1} parent=5 // pred_check
      _
    $region10: #{_lambda_.1} parent=5 // pred_check_branch
      %138 = sbr.rel (%p135) target = $region12
    $region11: #{_lambda_.1} parent=5 // pred_region
      %s139 = ssub.s32 %s10, 1
      // Predicated region
      $region13: #{_lambda_.1} parent=11 // pred_check
        %p140 = pneg %p57
      $region14: #{_lambda_.1} parent=11 // pred_check_branch
        %142 = sbr.rel (%p140) target = $region16
      $region15: #{_lambda_.1} parent=11 // pred_region
        _
      $region16: #{_lambda_.1} parent=11 // pred_fallthru
        _
      // Predicated region
      $region17: #{_lambda_.1} parent=11 // pred_check
        %p143 = pneg %p78
      $region18: #{_lambda_.1} parent=11 // pred_check_branch
        %145 = sbr.rel (%p143) target = $region20
      $region19: #{_lambda_.1} parent=11 // pred_region
        _
      $region20: #{_lambda_.1} parent=11 // pred_fallthru
        _
      // Predicated region
      $region21: #{_lambda_.1} parent=11 // pred_check
        %p146 = pneg %p99
      $region22: #{_lambda_.1} parent=11 // pred_check_branch
        %148 = sbr.rel (%p146) target = $region24
      $region23: #{_lambda_.1} parent=11 // pred_region
        _
      $region24: #{_lambda_.1} parent=11 // pred_fallthru
        _
    $region12: #{_lambda_.1} parent=5 // pred_fallthru
      _
    %p149 = scmp.lt.s32.totalorder %s10, 2
    // Predicated region
    $region25: #{_lambda_.1} parent=5 // pred_check
      %p150 = pneg %p149
    $region26: #{_lambda_.1} parent=5 // pred_check_branch
      %152 = sbr.rel (%p150) target = $region28
    $region27: #{_lambda_.1} parent=5 // pred_region
      // Predicated region
      $region29: #{_lambda_.1} parent=27 // pred_check
        %p153 = pneg %p30
      $region30: #{_lambda_.1} parent=27 // pred_check_branch
        %155 = sbr.rel (%p153) target = $region32
      $region31: #{_lambda_.1} parent=27 // pred_region
        %p156 = scmp.lt.s32.totalorder %s10, 1
        %s157 = scalar_select %p156, %s10, 1
        %s158 = smul.addr %s157, 2
        %s159 = smul.addr %s158, 4
        %s160 = scalar_lea.vmem %s0, %s159
      $region32: #{_lambda_.1} parent=27 // pred_fallthru
        _
    $region28: #{_lambda_.1} parent=5 // pred_fallthru
      _
    %p161 = scmp.le.s32.totalorder 1, %s10
    %p162 = scmp.lt.s32.totalorder %s10, 3
    %p163 = pnand %p161, %p162
    %p164 = pneg %p163
    // Predicated region
    $region33: #{_lambda_.1} parent=5 // pred_check
      _
    $region34: #{_lambda_.1} parent=5 // pred_check_branch
      %166 = sbr.rel (%p163) target = $region36
    $region35: #{_lambda_.1} parent=5 // pred_region
      %s167 = ssub.s32 %s10, 1
      %p168 = scmp.lt.s32.totalorder %s15, 1
      %s169 = scalar_select %p168, %s15, 1
      %s170 = smul.addr %s169, 2
      %s171 = smul.addr %s170, 4
      %s172 = scalar_lea.vmem %s0, %s171
      %p173 = pneg %p36
      %p174 = pneg %p33
      %p175 = pneg %p57
      %p176 = pneg %p54
      %p177 = pneg %p78
      %p178 = pneg %p75
      %p179 = pneg %p99
      %p180 = pneg %p96
      %p181 = pneg %p125
      %p182 = pneg %p122
      %p183 = scmp.lt.s32.totalorder %s15, 1
      %s184 = scalar_select %p183, %s15, 1
      %s185 = smul.addr %s184, 2
      %s186 = smul.addr %s185, 8
      %s187 = scalar_lea.vmem %s4, %s186
      %p188 = scmp.lt.s32.totalorder %s15, 1
      %s189 = scalar_select %p188, %s15, 1
      %s190 = smul.addr %s189, 2
      %s191 = smul.addr %s190, 4
      %s192 = scalar_lea.vmem %s0, %s191
      %p193 = scmp.lt.s32.totalorder %s15, 1
      %s194 = scalar_select %p193, %s15, 1
      %s195 = smul.addr %s194, 2
      %s196 = smul.addr %s195, 8
      %s197 = scalar_lea.vmem %s4, %s196
      %199 = vst [vmem:[#allocation2] sm:$0xff] 0.0
      %200 = vst [vmem:[#allocation2 + $0x8] sm:$0xff] 0.0
      %201 = vst [vmem:[#allocation2 + $0x10] sm:$0xff] 0.0
      %202 = vst [vmem:[#allocation2 + $0x18] sm:$0xff] 0.0
      %v203 = vlaneseq
      %v204 = vand.u32 %v203, 127
      %v205 = vadd.s32 %v204, 128
      %v206 = vand.u32 %v204, 15
      %v207 = vand.u32 %v205, 15
      %vm208 = vcmp.ge.s32.totalorder %v206, 1
      %vm209 = vcmp.ge.s32.totalorder %v207, 1
      %vm210 = vcmp.lt.s32.totalorder %v206, 17
      %vm211 = vcmp.lt.s32.totalorder %v207, 17
      %vm212 = vmand %vm208, %vm210
      %vm213 = vmand %vm209, %vm211
      %vm214 = vcmp.ge.s32.totalorder %v206, 4294967295
      %vm215 = vcmp.ge.s32.totalorder %v207, 4294967295
      %vm216 = vcmp.lt.s32.totalorder %v206, 15
      %vm217 = vcmp.lt.s32.totalorder %v207, 15
      %vm218 = vmand %vm214, %vm216
      %vm219 = vmand %vm215, %vm217
      %v220 = vld [vmem:[%s2] sm:$0xff]
      %v221 = vld [vmem:[%s1] sm:$0xf]
      %v222 = vld [vmem:[%s3] sm:$0xff]
      %v223 = vld [vmem:[%s192] sm:$0xff]
      %v225 = vcombine.high %v223, %v223
      %227 = vst [vmem:[#allocation2 + $0x8] sm:$0xf] %v223
      %228 = vst [vmem:[#allocation2 + $0x10] sm:$0xf] %v225
      %v229 = vld [vmem:[#allocation2] sm:$0xff]
      %v230 = vld [vmem:[#allocation2 + $0x8] sm:$0xff]
      %v231 = vld [vmem:[#allocation2 + $0x10] sm:$0xff]
      %v232 = vld [vmem:[#allocation2 + $0x18] sm:$0xff]
      %v233 = vsel %vm212, 1, 0
      %v234 = vsel %vm213, 1, 0
      %vm235 = vcmp.eq.s32.totalorder %v233, 1
      %vm236 = vcmp.eq.s32.totalorder %v234, 1
      %240 = vrot.lane.b32.xlu0 %v229, 17
      %v241 = vpop.permute.xlu0 %240
      %242 = vrot.lane.b32.xlu0 %v230, 17
      %v243 = vpop.permute.xlu0 %242
      %244 = vrot.lane.b32.xlu0 %v231, 17
      %v245 = vpop.permute.xlu0 %244
      %vm246 = vcmask 138240
      %v247 = vsel %vm246, %v241, %v243
      %v248 = vsel %vm246, %v243, %v245
      %v251 = vsel %vm235, %v247, 0.0
      %v252 = vsel %vm236, %v248, 0.0
      %253 = vst [vmem:[#allocation3] sm:$0xff] %v251
      %254 = vst [vmem:[#allocation3 + $0x8] sm:$0xff] %v252
      %255 = vrot.lane.b32.xlu0 %v229, 16
      %v256 = vpop.permute.xlu0 %255
      %257 = vrot.lane.b32.xlu0 %v230, 16
      %v258 = vpop.permute.xlu0 %257
      %259 = vrot.lane.b32.xlu0 %v231, 16
      %v260 = vpop.permute.xlu0 %259
      %vm261 = vcmask 130048
      %v262 = vsel %vm261, %v256, %v258
      %v263 = vsel %vm261, %v258, %v260
      %266 = vst [vmem:[#allocation3 + $0x10] sm:$0xff] %v262
      %267 = vst [vmem:[#allocation3 + $0x18] sm:$0xff] %v263
      %v268 = vsel %vm218, 1, 0
      %v269 = vsel %vm219, 1, 0
      %vm270 = vcmp.eq.s32.totalorder %v268, 1
      %vm271 = vcmp.eq.s32.totalorder %v269, 1
      %272 = vrot.lane.b32.xlu0 %v229, 15
      %v273 = vpop.permute.xlu0 %272
      %274 = vrot.lane.b32.xlu0 %v230, 15
      %v275 = vpop.permute.xlu0 %274
      %276 = vrot.lane.b32.xlu0 %v231, 15
      %v277 = vpop.permute.xlu0 %276
      %vm278 = vcmask 121856
      %v279 = vsel %vm278, %v273, %v275
      %v280 = vsel %vm278, %v275, %v277
      %v283 = vsel %vm270, %v279, 0.0
      %v284 = vsel %vm271, %v280, 0.0
      %285 = vst [vmem:[#allocation3 + $0x20] sm:$0xff] %v283
      %286 = vst [vmem:[#allocation3 + $0x28] sm:$0xff] %v284
      %287 = vrot.lane.b32.xlu0 %v229, 1
      %v288 = vpop.permute.xlu0 %287
      %289 = vrot.lane.b32.xlu0 %v230, 1
      %v290 = vpop.permute.xlu0 %289
      %291 = vrot.lane.b32.xlu0 %v231, 1
      %v292 = vpop.permute.xlu0 %291
      %vm293 = vcmask 7168
      %v294 = vsel %vm293, %v288, %v290
      %v295 = vsel %vm293, %v290, %v292
      %v298 = vsel %vm235, %v294, 0.0
      %v299 = vsel %vm236, %v295, 0.0
      %300 = vst [vmem:[#allocation3 + $0x30] sm:$0xff] %v298
      %301 = vst [vmem:[#allocation3 + $0x38] sm:$0xff] %v299
      %302 = vst [vmem:[#allocation3 + $0x40] sm:$0xff] %v230
      %303 = vst [vmem:[#allocation3 + $0x48] sm:$0xff] %v231
      %305 = vrot.lane.b32.xlu0 %v230, 127
      %v306 = vpop.permute.xlu0 %305
      %307 = vrot.lane.b32.xlu0 %v231, 127
      %v308 = vpop.permute.xlu0 %307
      %309 = vrot.lane.b32.xlu0 %v232, 127
      %v310 = vpop.permute.xlu0 %309
      %vm311 = vcmask 1039360
      %v312 = vsel %vm311, %v306, %v308
      %v313 = vsel %vm311, %v308, %v310
      %v316 = vsel %vm270, %v312, 0.0
      %v317 = vsel %vm271, %v313, 0.0
      %318 = vst [vmem:[#allocation3 + $0x50] sm:$0xff] %v316
      %319 = vst [vmem:[#allocation3 + $0x58] sm:$0xff] %v317
      %320 = vrot.lane.b32.xlu0 %v230, 113
      %v321 = vpop.permute.xlu0 %320
      %322 = vrot.lane.b32.xlu0 %v231, 113
      %v323 = vpop.permute.xlu0 %322
      %324 = vrot.lane.b32.xlu0 %v232, 113
      %v325 = vpop.permute.xlu0 %324
      %vm326 = vcmask 924672
      %v327 = vsel %vm326, %v321, %v323
      %v328 = vsel %vm326, %v323, %v325
      %v331 = vsel %vm235, %v327, 0.0
      %v332 = vsel %vm236, %v328, 0.0
      %333 = vst [vmem:[#allocation3 + $0x60] sm:$0xff] %v331
      %334 = vst [vmem:[#allocation3 + $0x68] sm:$0xff] %v332
      %335 = vrot.lane.b32.xlu0 %v230, 112
      %v336 = vpop.permute.xlu0 %335
      %337 = vrot.lane.b32.xlu0 %v231, 112
      %v338 = vpop.permute.xlu0 %337
      %339 = vrot.lane.b32.xlu0 %v232, 112
      %v340 = vpop.permute.xlu0 %339
      %vm341 = vcmask 916480
      %v342 = vsel %vm341, %v336, %v338
      %v343 = vsel %vm341, %v338, %v340
      %346 = vst [vmem:[#allocation3 + $0x70] sm:$0xff] %v342
      %347 = vst [vmem:[#allocation3 + $0x78] sm:$0xff] %v343
      %348 = vrot.lane.b32.xlu0 %v230, 111
      %v349 = vpop.permute.xlu0 %348
      %350 = vrot.lane.b32.xlu0 %v231, 111
      %v351 = vpop.permute.xlu0 %350
      %352 = vrot.lane.b32.xlu0 %v232, 111
      %v353 = vpop.permute.xlu0 %352
      %vm354 = vcmask 908288
      %v355 = vsel %vm354, %v349, %v351
      %v356 = vsel %vm354, %v351, %v353
      %v359 = vsel %vm270, %v355, 0.0
      %v360 = vsel %vm271, %v356, 0.0
      %361 = vst [vmem:[#allocation3 + $0x80] sm:$0xff] %v359
      %362 = vst [vmem:[#allocation3 + $0x88] sm:$0xff] %v360
      %v363 = vld [vmem:[#allocation3] sm:$0xff]
      %v364 = vld [vmem:[#allocation3 + $0x8] sm:$0xff]
      %v365 = vld [vmem:[#allocation3 + $0x10] sm:$0xff]
      %v366 = vld [vmem:[#allocation3 + $0x18] sm:$0xff]
      %v367 = vld [vmem:[#allocation3 + $0x20] sm:$0xff]
      %v368 = vld [vmem:[#allocation3 + $0x28] sm:$0xff]
      %v369 = vld [vmem:[#allocation3 + $0x30] sm:$0xff]
      %v370 = vld [vmem:[#allocation3 + $0x38] sm:$0xff]
      %v371 = vld [vmem:[#allocation3 + $0x40] sm:$0xff]
      %v372 = vld [vmem:[#allocation3 + $0x48] sm:$0xff]
      %v373 = vld [vmem:[#allocation3 + $0x50] sm:$0xff]
      %v374 = vld [vmem:[#allocation3 + $0x58] sm:$0xff]
      %v375 = vld [vmem:[#allocation3 + $0x60] sm:$0xff]
      %v376 = vld [vmem:[#allocation3 + $0x68] sm:$0xff]
      %v377 = vld [vmem:[#allocation3 + $0x70] sm:$0xff]
      %v378 = vld [vmem:[#allocation3 + $0x78] sm:$0xff]
      %v379 = vld [vmem:[#allocation3 + $0x80] sm:$0xff]
      %v380 = vld [vmem:[#allocation3 + $0x88] sm:$0xff]
      %v381 = vpack.c.bf16 %v365, %v363
      %v382 = vpack.c.bf16 %v366, %v364
      %v383 = vpack.c.bf16 %v369, %v367
      %v384 = vpack.c.bf16 %v370, %v368
      %v385 = vpack.c.bf16 %v373, %v371
      %v386 = vpack.c.bf16 %v374, %v372
      %v387 = vpack.c.bf16 %v377, %v375
      %v388 = vpack.c.bf16 %v378, %v376
      %v389 = vpack.c.bf16 %v379, %v379
      %v390 = vpack.c.bf16 %v380, %v380
      %392 = vset.pattern.permute.xlu0 0
      %393 = vperm.xlu0 %392, %v220
      %v394 = vpop.permute.xlu0 %393
      %vm396 = vcmask 588800
      %v398 = vsel %vm396, %v221, 0
      %vm400 = vcmask 1043456
      %v402 = vsel %vm400, %v389, 0
      %v405 = vsel %vm400, %v390, 0
      %407 = vmatprep.subr.bf16.mxu0 %v382
      %408 = vmatpush1.bf16.msra.mxu0 %v381
      %409 = vmatprep.subr.bf16.mxu0 %v384
      %410 = vmatpush1.bf16.msra.mxu0 %v383
      %411 = vmatprep.subr.bf16.mxu0 %v386
      %412 = vmatpush1.bf16.msra.mxu0 %v385
      %413 = vmatprep.subr.bf16.mxu0 %v388
      %414 = vmatpush1.bf16.msra.mxu0 %v387
      %415 = vmatprep.subr.bf16.mxu0 %v405
      %416 = vmatpush1.bf16.msra.mxu0 %v402
      %417 = vmatprep.subr.bf16.mxu0 0
      %418 = vmatpush1.bf16.msra.mxu0 0
      %419 = vmatprep.subr.bf16.mxu0 0
      %420 = vmatpush1.bf16.msra.mxu0 0
      %421 = vmatprep.subr.bf16.mxu0 0
      %422 = vmatpush1.bf16.msra.mxu0 0
      %423 = vmatprep.subr.bf16.mxu0 0
      %424 = vmatpush1.bf16.msra.mxu0 0
      %425 = vmatprep.subr.bf16.mxu0 0
      %426 = vmatpush1.bf16.msra.mxu0 0
      %427 = vmatprep.subr.bf16.mxu0 0
      %428 = vmatpush1.bf16.msra.mxu0 0
      %429 = vmatprep.subr.bf16.mxu0 0
      %430 = vmatpush1.bf16.msra.mxu0 0
      %431 = vmatprep.subr.bf16.mxu0 0
      %432 = vmatpush1.bf16.msra.mxu0 0
      %433 = vmatprep.subr.bf16.mxu0 0
      %434 = vmatpush1.bf16.msra.mxu0 0
      %435 = vmatprep.subr.bf16.mxu0 0
      %436 = vmatpush1.bf16.msra.mxu0 0
      %437 = vmatprep.subr.bf16.mxu0 0
      %438 = vmatpush1.bf16.msra.mxu0 0
      %439 = vmatprep.mubr.bf16.mxu0 0
      %440 = vmatmul.mubr.bf16.gmra.mrb[0].mxu0 %v398
      %v441 = vpop.f32.mrb[0].mxu0
      %v442 = vadd.f32 %v394, %v441
      %v443 = vpop.f32.mrb[0].mxu0
      %v444 = vadd.f32 %v394, %v443
      %v445 = vpop.f32.mrb[0].mxu0
      %v446 = vpop.f32.mrb[0].mxu0
      %447 = vdwg.mxu0
      %v448 = vmax.f32 %v442, 0.0
      %v449 = vmax.f32 %v444, 0.0
      %vm450 = vcmp.gt.f32.partialorder %v448, %v394
      %vm451 = vcmp.gt.f32.partialorder %v449, %v394
      %v452 = vsel %vm450, 1.0, 0.0
      %v453 = vsel %vm451, 1.0, 0.0
      %v454 = vadd.f32 %v448, %v452
      %v455 = vadd.f32 %v449, %v453
      %v456 = vadd.f32 %v454, %v455
      %457 = vadd.xlane.f32.xlu0 %v456
      %v458 = vpop.xlane.xlu0 %457
      %v459 = vmul.f32 %v458, 0.00390625
      %vm460 = vcmask 64512
      %v462 = vsel %vm460, %v222, 0
      %464 = vmatprep.subr.mxu0 0.0
      %465 = vmatpush1.msra.mxu0 %v459
      %466 = vmatprep.subr.mxu0 0.0
      %467 = vmatpush1.msra.mxu0 0.0
      %468 = vmatprep.subr.mxu0 0.0
      %469 = vmatpush1.msra.mxu0 0.0
      %470 = vmatprep.subr.mxu0 0.0
      %471 = vmatpush1.msra.mxu0 0.0
      %472 = vmatprep.subr.mxu0 0.0
      %473 = vmatpush1.msra.mxu0 0.0
      %474 = vmatprep.subr.mxu0 0.0
      %475 = vmatpush1.msra.mxu0 0.0
      %476 = vmatprep.subr.mxu0 0.0
      %477 = vmatpush1.msra.mxu0 0.0
      %478 = vmatprep.subr.mxu0 0.0
      %479 = vmatpush1.msra.mxu0 0.0
      %480 = vmatprep.subr.mxu0 0.0
      %481 = vmatpush1.msra.mxu0 0.0
      %482 = vmatprep.subr.mxu0 0.0
      %483 = vmatpush1.msra.mxu0 0.0
      %484 = vmatprep.subr.mxu0 0.0
      %485 = vmatpush1.msra.mxu0 0.0
      %486 = vmatprep.subr.mxu0 0.0
      %487 = vmatpush1.msra.mxu0 0.0
      %488 = vmatprep.subr.mxu0 0.0
      %489 = vmatpush1.msra.mxu0 0.0
      %490 = vmatprep.subr.mxu0 0.0
      %491 = vmatpush1.msra.mxu0 0.0
      %492 = vmatprep.subr.mxu0 0.0
      %493 = vmatpush1.msra.mxu0 0.0
      %494 = vmatprep.subr.mxu0 0.0
      %495 = vmatpush1.msra.mxu0 0.0
      %496 = vmatprep.subr.mxu0 0.0
      %497 = vmatpush1.msra.mxu0 0.0
      %498 = vmatprep.subr.mxu0 0.0
      %499 = vmatpush1.msra.mxu0 0.0
      %500 = vmatprep.subr.mxu0 0.0
      %501 = vmatpush1.msra.mxu0 0.0
      %502 = vmatprep.subr.mxu0 0.0
      %503 = vmatpush1.msra.mxu0 0.0
      %504 = vmatprep.subr.mxu0 0.0
      %505 = vmatpush1.msra.mxu0 0.0
      %506 = vmatprep.subr.mxu0 0.0
      %507 = vmatpush1.msra.mxu0 0.0
      %508 = vmatprep.subr.mxu0 0.0
      %509 = vmatpush1.msra.mxu0 0.0
      %510 = vmatprep.subr.mxu0 0.0
      %511 = vmatpush1.msra.mxu0 0.0
      %512 = vmatprep.subr.mxu0 0.0
      %513 = vmatpush1.msra.mxu0 0.0
      %514 = vmatprep.subr.mxu0 0.0
      %515 = vmatpush1.msra.mxu0 0.0
      %516 = vmatprep.subr.mxu0 0.0
      %517 = vmatpush1.msra.mxu0 0.0
      %518 = vmatprep.subr.mxu0 0.0
      %519 = vmatpush1.msra.mxu0 0.0
      %520 = vmatprep.subr.mxu0 0.0
      %521 = vmatpush1.msra.mxu0 0.0
      %522 = vmatprep.subr.mxu0 0.0
      %523 = vmatpush1.msra.mxu0 0.0
      %524 = vmatprep.subr.mxu0 0.0
      %525 = vmatpush1.msra.mxu0 0.0
      %526 = vmatprep.subr.mxu0 0.0
      %527 = vmatpush1.msra.mxu0 0.0
      %528 = vmatprep.mubr.f32.mxu0 0.0
      %529 = vmatmul.mubr.f32.gmra.mrb[0].mxu0 %v462
      %v530 = vpop.f32.mrb[0].mxu0
      %v531 = vadd.f32 0.0, %v530
      %v532 = vpop.f32.mrb[0].mxu0
      %533 = vdwg.mxu0
      %v534 = vadd.f32 %v531, 3.0
      %v535 = vmax.f32 %v534, 0.0
      %v536 = vmin.f32 %v535, 6.0
      %v537 = vmul.f32 %v536, 0.16666667
      %539 = vset.pattern.permute.xlu0 0
      %540 = vperm.xlu0 %539, %v537
      %v541 = vpop.permute.xlu0 %540
      %v543 = vmul.f32 %v448, %v541
      %v544 = vmul.f32 %v449, %v541
      %545 = vst [vmem:[%s197] sm:$0xff] %v543
      %546 = vst [vmem:[%s197 + $0x8] sm:$0xff] %v544
      %p547 = scmp.lt.s32.totalorder %s15, 1
      %s548 = scalar_select %p547, %s15, 1
      %s549 = smul.addr %s548, 2
      %s550 = smul.addr %s549, 8
      %s551 = scalar_lea.vmem %s4, %s550
      // Predicated region
      $region37: #{_lambda_.1} parent=35 // pred_check
        %p552 = pneg %p122
      $region38: #{_lambda_.1} parent=35 // pred_check_branch
        %554 = sbr.rel (%p552) target = $region40
      $region39: #{_lambda_.1} parent=35 // pred_region
        _
      $region40: #{_lambda_.1} parent=35 // pred_fallthru
        _
    $region36: #{_lambda_.1} parent=5 // pred_fallthru
      _
    %p555 = scmp.le.s32.totalorder 2, %s10
    // Predicated region
    $region41: #{_lambda_.1} parent=5 // pred_check
      %p556 = pneg %p555
    $region42: #{_lambda_.1} parent=5 // pred_check_branch
      %558 = sbr.rel (%p556) target = $region44
    $region43: #{_lambda_.1} parent=5 // pred_region
      %s559 = ssub.s32 %s10, 2
      // Predicated region
      $region45: #{_lambda_.1} parent=43 // pred_check
        %p560 = pneg %p128
      $region46: #{_lambda_.1} parent=43 // pred_check_branch
        %562 = sbr.rel (%p560) target = $region48
      $region47: #{_lambda_.1} parent=43 // pred_region
        %p563 = scmp.lt.s32.totalorder %s16, 1
        %s564 = scalar_select %p563, %s16, 1
        %s565 = smul.addr %s564, 2
        %s566 = smul.addr %s565, 8
        %s567 = scalar_lea.vmem %s4, %s566
      $region48: #{_lambda_.1} parent=43 // pred_fallthru
        _
    $region44: #{_lambda_.1} parent=5 // pred_fallthru
      _
  $region6: #{_lambda_.1} parent=0 // loop_footer
    %s14 = sadd.s32 1, %s10
  $region7: #{_lambda_.1} parent=0 // loop_footer_branch
    %9 = sbr.rel target = $region3
  $region8: #{_lambda_.1} parent=0 // loop_exit
    _

</llo_original>
